<compile_context>
chip_gen: v6e
topology: v6e:2x2x1
jax: 0.10.0
libtpu: 0.0.40
codegen_flags: <defaults>
</compile_context>

<pallas_src>
import functools

import jax
import jax.numpy as jnp
from jax.experimental import pallas as pl
from jax.experimental.pallas import tpu as pltpu

SELU_ALPHA = 1.6732632423543772
SELU_SCALE = 1.0507009873554805


def _selu(x):
    # SELU: scale * (x if x > 0 else alpha * (exp(x) - 1)).
    # exp argument clamped to <= 0 so the unselected branch never produces inf.
    return SELU_SCALE * jnp.where(
        x > 0, x, SELU_ALPHA * (jnp.exp(jnp.minimum(x, 0.0)) - 1.0))


def _mlp_kernel(x_ref, w1_ref, b1_ref, w2_ref, b2_ref, w3_ref, b3_ref,
                w4_ref, b4_ref, o_ref):
    cdt = x_ref.dtype  # matmul-input dtype (bf16 or f32); SELU/bias math stays f32

    # Layer 1: Linear + SELU (+ Dropout == identity in eval mode)
    h = jnp.dot(x_ref[...], w1_ref[...],
                preferred_element_type=jnp.float32) + b1_ref[...]
    h = _selu(h)

    # Layer 2
    h = jnp.dot(h.astype(cdt), w2_ref[...],
                preferred_element_type=jnp.float32) + b2_ref[...]
    h = _selu(h)

    # Layer 3
    h = jnp.dot(h.astype(cdt), w3_ref[...],
                preferred_element_type=jnp.float32) + b3_ref[...]
    h = _selu(h)

    # Output head: w4 is a (1, H) row; contract the last dims (trans_b form) so the
    # result is a lane-dense (1, block_b) row instead of pushing a 1-lane (block_b, 1)
    # column through an N=1 MXU pass + masked stores.
    out_row = jax.lax.dot_general(
        w4_ref[...], h.astype(cdt),
        dimension_numbers=(((1,), (1,)), ((), ())),
        preferred_element_type=jnp.float32)
    o_ref[...] = (out_row + b4_ref[0, 0]).astype(o_ref.dtype)


def _round_up(n: int, m: int) -> int:
    return ((n + m - 1) // m) * m


@functools.partial(jax.jit, static_argnames=("block_b", "compute_dtype"))
def grasp_energy_forward(x, params, *, block_b=256, compute_dtype=jnp.bfloat16):
    """Forward pass of GraspEnergyNetwork.

    x: (B, D_in) float32
    params: dict with w1 (D_in,H), b1 (1,H), w2 (H,H), b2 (1,H),
            w3 (H,H), b3 (1,H), w4 (H,1), b4 (1,1)   (weights stored as (in, out))
    returns: (B, 1) float32
    """
    B, D_in = x.shape
    H = params["w1"].shape[1]

    # Batch tile: MXU-aligned for large batches; 8-aligned shrink for tiny batches so
    # we do not pad a handful of rows up to 256.
    eff_block = block_b if B >= block_b else _round_up(max(B, 1), 8)
    B_pad = _round_up(B, eff_block)
    # Pad the contraction dim to a lane-dense multiple of 128; the extra zero columns
    # hit zero-padded w1 rows, so the math is unchanged.
    D_pad = _round_up(D_in, 128)

    x_p = jnp.zeros((B_pad, D_pad), compute_dtype).at[:B, :D_in].set(
        x.astype(compute_dtype))
    w1 = jnp.zeros((D_pad, H), compute_dtype).at[:D_in, :].set(
        params["w1"].astype(compute_dtype))
    w2 = params["w2"].astype(compute_dtype)
    w3 = params["w3"].astype(compute_dtype)
    w4_row = params["w4"].reshape(1, H).astype(compute_dtype)  # (1, H) row for trans_b head
    b1 = params["b1"].astype(jnp.float32)
    b2 = params["b2"].astype(jnp.float32)
    b3 = params["b3"].astype(jnp.float32)
    b4 = params["b4"].reshape(1, 1).astype(jnp.float32)

    grid = (B_pad // eff_block,)
    # NOTE(v7x): for best 2-TensorCore utilization the grid length should be >= 2 and
    # even; with block_b=256 that only needs B >= 512.  At very large block_b (>=4096)
    # budget VMEM against the 64 MiB v7x ceiling and set vmem_limit_bytes.

    def resident(arr):
        # Whole-array block with a constant index_map: stays resident in VMEM across
        # the grid (no re-DMA).  Total weight footprint is ~0.6 MiB (bf16: ~0.3 MiB),
        # so the implicit double-buffer allocation is irrelevant; no need for
        # pipeline_mode=pl.Buffered(1).
        return pl.BlockSpec(arr.shape, lambda i: (0,) * arr.ndim)

    in_specs = [
        pl.BlockSpec((eff_block, D_pad), lambda i: (i, 0)),    # x tile
        resident(w1), resident(b1),
        resident(w2), resident(b2),
        resident(w3), resident(b3),
        resident(w4_row),
        pl.BlockSpec(memory_space=pltpu.MemorySpace.SMEM),     # b4 scalar
    ]
    # Lane-dense output: one (1, eff_block) row per grid step.
    out_specs = pl.BlockSpec((1, eff_block), lambda i: (0, i))

    out_row = pl.pallas_call(
        _mlp_kernel,
        out_shape=jax.ShapeDtypeStruct((1, B_pad), jnp.float32),
        grid_spec=pltpu.PrefetchScalarGridSpec(
            num_scalar_prefetch=0,
            grid=grid,
            in_specs=in_specs,
            out_specs=out_specs,
        ),
        compiler_params=pltpu.CompilerParams(
            dimension_semantics=("parallel",)),
    )(x_p, w1, b1, w2, b2, w3, b3, w4_row, b4)

    return out_row[0, :B].reshape(B, 1)


def init_params(key, input_dim, hidden_dims=(256, 256, 256)):
    """Deterministic init matching the module: kaiming_normal_(nonlinearity='linear')
    => std = 1/sqrt(fan_in); biases zero.  Weights stored as (in, out)."""
    h0, h1, h2 = hidden_dims
    keys = jax.random.split(key, 4)

    def kaiming(k, fan_in, fan_out):
        std = 1.0 / jnp.sqrt(fan_in)
        return jax.random.normal(k, (fan_in, fan_out), dtype=jnp.float32) * std

    return {
        "w1": kaiming(keys[0], input_dim, h0), "b1": jnp.zeros((1, h0), jnp.float32),
        "w2": kaiming(keys[1], h0, h1),        "b2": jnp.zeros((1, h1), jnp.float32),
        "w3": kaiming(keys[2], h1, h2),        "b3": jnp.zeros((1, h2), jnp.float32),
        "w4": kaiming(keys[3], h2, 1),         "b4": jnp.zeros((1, 1), jnp.float32),
    }


def reference_forward(x, params, compute_dtype=jnp.float32):
    def mm(a, w):
        return jnp.dot(a.astype(compute_dtype), w.astype(compute_dtype),
                       preferred_element_type=jnp.float32)
    h = _selu(mm(x, params["w1"]) + params["b1"])
    h = _selu(mm(h, params["w2"]) + params["b2"])
    h = _selu(mm(h, params["w3"]) + params["b3"])
    return mm(h, params["w4"]) + params["b4"]


if __name__ == "__main__":
    key = jax.random.PRNGKey(0)
    k_x, k_p = jax.random.split(key)

    B, D_IN, HIDDEN = 16, 64, 256
    x = jax.random.normal(k_x, (B, D_IN), dtype=jnp.float32)
    params = init_params(k_p, D_IN, hidden_dims=(HIDDEN, HIDDEN, HIDDEN))

    # f32 compute path: matches the PyTorch module's numerics.
    out_f32 = jax.block_until_ready(
        grasp_energy_forward(x, params, compute_dtype=jnp.float32))
    ref_f32 = reference_forward(x, params, compute_dtype=jnp.float32)
    assert out_f32.shape == (B, 1)
    assert jnp.allclose(out_f32, ref_f32, atol=1e-3, rtol=1e-3), "f32 mismatch vs reference"

    # bf16 matmul path (default): fast path for v6e/v7x; compared against a reference
    # that applies the same bf16 input rounding with f32 accumulation.
    out_bf16 = jax.block_until_ready(grasp_energy_forward(x, params))
    ref_bf16 = reference_forward(x, params, compute_dtype=jnp.bfloat16)
    assert out_bf16.shape == (B, 1)
    assert jnp.allclose(out_bf16, ref_bf16, atol=1e-2, rtol=1e-2), "bf16 mismatch vs reference"

    print("KERNEL_OK")
</pallas_src>

<mosaic_0001>
module attributes {stable_mosaic.version = 11 : i64} {
  func.func @_mlp_kernel(%arg0: i32, %arg1: memref<16x128xf32, #tpu.memory_space<vmem>>, %arg2: memref<128x256xf32, #tpu.memory_space<vmem>>, %arg3: memref<1x256xf32, #tpu.memory_space<vmem>>, %arg4: memref<256x256xf32, #tpu.memory_space<vmem>>, %arg5: memref<1x256xf32, #tpu.memory_space<vmem>>, %arg6: memref<256x256xf32, #tpu.memory_space<vmem>>, %arg7: memref<1x256xf32, #tpu.memory_space<vmem>>, %arg8: memref<1x256xf32, #tpu.memory_space<vmem>>, %arg9: memref<1x1xf32, #tpu.memory_space<smem>>, %arg10: memref<1x16xf32, #tpu.memory_space<vmem>>) attributes {dimension_semantics = [#tpu.dimension_semantics<parallel>], iteration_bounds = array<i64: 1>, scalar_prefetch = 0 : i64, scratch_operands = 0 : i64, tpu.core_type = #tpu.core_type<tc>, window_params = [{transform_indices = @transform_0, window_bounds = array<i64: 16, 128>}, {pipeline_mode = #tpu.pipeline_mode<synchronous>, transform_indices = @transform_1, window_bounds = array<i64: 128, 256>}, {pipeline_mode = #tpu.pipeline_mode<synchronous>, transform_indices = @transform_2, window_bounds = array<i64: 1, 256>}, {pipeline_mode = #tpu.pipeline_mode<synchronous>, transform_indices = @transform_3, window_bounds = array<i64: 256, 256>}, {pipeline_mode = #tpu.pipeline_mode<synchronous>, transform_indices = @transform_4, window_bounds = array<i64: 1, 256>}, {pipeline_mode = #tpu.pipeline_mode<synchronous>, transform_indices = @transform_5, window_bounds = array<i64: 256, 256>}, {pipeline_mode = #tpu.pipeline_mode<synchronous>, transform_indices = @transform_6, window_bounds = array<i64: 1, 256>}, {pipeline_mode = #tpu.pipeline_mode<synchronous>, transform_indices = @transform_7, window_bounds = array<i64: 1, 256>}, {transform_indices = @transform_8, window_bounds = array<i64: 1, 1>}, {transform_indices = @transform_9, window_bounds = array<i64: 1, 16>}]} {
    %c0 = arith.constant 0 : index
    %c0_0 = arith.constant 0 : index
    %0 = vector.load %arg1[%c0, %c0_0] : memref<16x128xf32, #tpu.memory_space<vmem>>, vector<16x128xf32>
    %c0_1 = arith.constant 0 : index
    %c0_2 = arith.constant 0 : index
    %1 = vector.load %arg2[%c0_1, %c0_2] : memref<128x256xf32, #tpu.memory_space<vmem>>, vector<128x256xf32>
    %cst = arith.constant dense<0.000000e+00> : vector<16x256xf32>
    %2 = tpu.matmul %0, %1, %cst {dimension_numbers = #tpu.dot_dimension_numbers<[1], [0], [0], [1], [0, 0, 1, 1], [], []>} : vector<16x128xf32>, vector<128x256xf32>, vector<16x256xf32> -> vector<16x256xf32>
    %c0_3 = arith.constant 0 : index
    %c0_4 = arith.constant 0 : index
    %3 = vector.load %arg3[%c0_3, %c0_4] : memref<1x256xf32, #tpu.memory_space<vmem>>, vector<1x256xf32>
    %4 = vector.broadcast %3 : vector<1x256xf32> to vector<16x256xf32>
    %5 = arith.addf %2, %4 : vector<16x256xf32>
    %cst_5 = arith.constant 0.000000e+00 : f32
    %6 = vector.broadcast %cst_5 : f32 to vector<16x256xf32>
    %7 = arith.cmpf ogt, %5, %6 : vector<16x256xf32>
    %cst_6 = arith.constant 0.000000e+00 : f32
    %8 = vector.broadcast %cst_6 : f32 to vector<16x256xf32>
    %9 = arith.minimumf %5, %8 : vector<16x256xf32>
    %10 = math.exp %9 : vector<16x256xf32>
    %cst_7 = arith.constant 1.000000e+00 : f32
    %11 = vector.broadcast %cst_7 : f32 to vector<16x256xf32>
    %12 = arith.subf %10, %11 : vector<16x256xf32>
    %cst_8 = arith.constant 1.67326319 : f32
    %13 = vector.broadcast %cst_8 : f32 to vector<16x256xf32>
    %14 = arith.mulf %13, %12 : vector<16x256xf32>
    %15 = arith.select %7, %5, %14 : vector<16x256xi1>, vector<16x256xf32>
    %cst_9 = arith.constant 1.05070102 : f32
    %16 = vector.broadcast %cst_9 : f32 to vector<16x256xf32>
    %17 = arith.mulf %16, %15 : vector<16x256xf32>
    %c0_10 = arith.constant 0 : index
    %c0_11 = arith.constant 0 : index
    %18 = vector.load %arg4[%c0_10, %c0_11] : memref<256x256xf32, #tpu.memory_space<vmem>>, vector<256x256xf32>
    %cst_12 = arith.constant dense<0.000000e+00> : vector<16x256xf32>
    %19 = tpu.matmul %17, %18, %cst_12 {dimension_numbers = #tpu.dot_dimension_numbers<[1], [0], [0], [1], [0, 0, 1, 1], [], []>} : vector<16x256xf32>, vector<256x256xf32>, vector<16x256xf32> -> vector<16x256xf32>
    %c0_13 = arith.constant 0 : index
    %c0_14 = arith.constant 0 : index
    %20 = vector.load %arg5[%c0_13, %c0_14] : memref<1x256xf32, #tpu.memory_space<vmem>>, vector<1x256xf32>
    %21 = vector.broadcast %20 : vector<1x256xf32> to vector<16x256xf32>
    %22 = arith.addf %19, %21 : vector<16x256xf32>
    %cst_15 = arith.constant 0.000000e+00 : f32
    %23 = vector.broadcast %cst_15 : f32 to vector<16x256xf32>
    %24 = arith.cmpf ogt, %22, %23 : vector<16x256xf32>
    %cst_16 = arith.constant 0.000000e+00 : f32
    %25 = vector.broadcast %cst_16 : f32 to vector<16x256xf32>
    %26 = arith.minimumf %22, %25 : vector<16x256xf32>
    %27 = math.exp %26 : vector<16x256xf32>
    %cst_17 = arith.constant 1.000000e+00 : f32
    %28 = vector.broadcast %cst_17 : f32 to vector<16x256xf32>
    %29 = arith.subf %27, %28 : vector<16x256xf32>
    %cst_18 = arith.constant 1.67326319 : f32
    %30 = vector.broadcast %cst_18 : f32 to vector<16x256xf32>
    %31 = arith.mulf %30, %29 : vector<16x256xf32>
    %32 = arith.select %24, %22, %31 : vector<16x256xi1>, vector<16x256xf32>
    %cst_19 = arith.constant 1.05070102 : f32
    %33 = vector.broadcast %cst_19 : f32 to vector<16x256xf32>
    %34 = arith.mulf %33, %32 : vector<16x256xf32>
    %c0_20 = arith.constant 0 : index
    %c0_21 = arith.constant 0 : index
    %35 = vector.load %arg6[%c0_20, %c0_21] : memref<256x256xf32, #tpu.memory_space<vmem>>, vector<256x256xf32>
    %cst_22 = arith.constant dense<0.000000e+00> : vector<16x256xf32>
    %36 = tpu.matmul %34, %35, %cst_22 {dimension_numbers = #tpu.dot_dimension_numbers<[1], [0], [0], [1], [0, 0, 1, 1], [], []>} : vector<16x256xf32>, vector<256x256xf32>, vector<16x256xf32> -> vector<16x256xf32>
    %c0_23 = arith.constant 0 : index
    %c0_24 = arith.constant 0 : index
    %37 = vector.load %arg7[%c0_23, %c0_24] : memref<1x256xf32, #tpu.memory_space<vmem>>, vector<1x256xf32>
    %38 = vector.broadcast %37 : vector<1x256xf32> to vector<16x256xf32>
    %39 = arith.addf %36, %38 : vector<16x256xf32>
    %cst_25 = arith.constant 0.000000e+00 : f32
    %40 = vector.broadcast %cst_25 : f32 to vector<16x256xf32>
    %41 = arith.cmpf ogt, %39, %40 : vector<16x256xf32>
    %cst_26 = arith.constant 0.000000e+00 : f32
    %42 = vector.broadcast %cst_26 : f32 to vector<16x256xf32>
    %43 = arith.minimumf %39, %42 : vector<16x256xf32>
    %44 = math.exp %43 : vector<16x256xf32>
    %cst_27 = arith.constant 1.000000e+00 : f32
    %45 = vector.broadcast %cst_27 : f32 to vector<16x256xf32>
    %46 = arith.subf %44, %45 : vector<16x256xf32>
    %cst_28 = arith.constant 1.67326319 : f32
    %47 = vector.broadcast %cst_28 : f32 to vector<16x256xf32>
    %48 = arith.mulf %47, %46 : vector<16x256xf32>
    %49 = arith.select %41, %39, %48 : vector<16x256xi1>, vector<16x256xf32>
    %cst_29 = arith.constant 1.05070102 : f32
    %50 = vector.broadcast %cst_29 : f32 to vector<16x256xf32>
    %51 = arith.mulf %50, %49 : vector<16x256xf32>
    %c0_30 = arith.constant 0 : index
    %c0_31 = arith.constant 0 : index
    %52 = vector.load %arg8[%c0_30, %c0_31] : memref<1x256xf32, #tpu.memory_space<vmem>>, vector<1x256xf32>
    %cst_32 = arith.constant dense<0.000000e+00> : vector<1x16xf32>
    %53 = tpu.matmul %52, %51, %cst_32 {dimension_numbers = #tpu.dot_dimension_numbers<[1], [1], [0], [0], [0, 0, 1, 0], [], []>} : vector<1x256xf32>, vector<16x256xf32>, vector<1x16xf32> -> vector<1x16xf32>
    %c0_33 = arith.constant 0 : index
    %c0_34 = arith.constant 0 : index
    %54 = memref.load %arg9[%c0_33, %c0_34] : memref<1x1xf32, #tpu.memory_space<smem>>
    %55 = vector.broadcast %54 : f32 to vector<1x16xf32>
    %56 = arith.addf %53, %55 : vector<1x16xf32>
    %c0_35 = arith.constant 0 : index
    %c0_36 = arith.constant 0 : index
    %57 = vector.load %arg10[%c0_35, %c0_36] : memref<1x16xf32, #tpu.memory_space<vmem>>, vector<1x16xf32>
    tpu.vector_store %arg10[%c0_35, %c0_36], %56 {strides = array<i32>} : memref<1x16xf32, #tpu.memory_space<vmem>>, vector<1x16xf32>,
    return
  }
  func.func @transform_0(%arg0: i32) -> (i32, i32) {
    %c0_i32 = arith.constant 0 : i32
    %c0_i32_0 = arith.constant 0 : i32
    return %arg0, %c0_i32 : i32, i32
  }
  func.func @transform_1(%arg0: i32) -> (i32, i32) {
    %c0_i32 = arith.constant 0 : i32
    %c0_i32_0 = arith.constant 0 : i32
    %c0_i32_1 = arith.constant 0 : i32
    return %c0_i32, %c0_i32_0 : i32, i32
  }
  func.func @transform_2(%arg0: i32) -> (i32, i32) {
    %c0_i32 = arith.constant 0 : i32
    %c0_i32_0 = arith.constant 0 : i32
    %c0_i32_1 = arith.constant 0 : i32
    return %c0_i32, %c0_i32_0 : i32, i32
  }
  func.func @transform_3(%arg0: i32) -> (i32, i32) {
    %c0_i32 = arith.constant 0 : i32
    %c0_i32_0 = arith.constant 0 : i32
    %c0_i32_1 = arith.constant 0 : i32
    return %c0_i32, %c0_i32_0 : i32, i32
  }
  func.func @transform_4(%arg0: i32) -> (i32, i32) {
    %c0_i32 = arith.constant 0 : i32
    %c0_i32_0 = arith.constant 0 : i32
    %c0_i32_1 = arith.constant 0 : i32
    return %c0_i32, %c0_i32_0 : i32, i32
  }
  func.func @transform_5(%arg0: i32) -> (i32, i32) {
    %c0_i32 = arith.constant 0 : i32
    %c0_i32_0 = arith.constant 0 : i32
    %c0_i32_1 = arith.constant 0 : i32
    return %c0_i32, %c0_i32_0 : i32, i32
  }
  func.func @transform_6(%arg0: i32) -> (i32, i32) {
    %c0_i32 = arith.constant 0 : i32
    %c0_i32_0 = arith.constant 0 : i32
    %c0_i32_1 = arith.constant 0 : i32
    return %c0_i32, %c0_i32_0 : i32, i32
  }
  func.func @transform_7(%arg0: i32) -> (i32, i32) {
    %c0_i32 = arith.constant 0 : i32
    %c0_i32_0 = arith.constant 0 : i32
    %c0_i32_1 = arith.constant 0 : i32
    return %c0_i32, %c0_i32_0 : i32, i32
  }
  func.func @transform_8(%arg0: i32) -> (i32, i32) {
    %c0_i32 = arith.constant 0 : i32
    %c0_i32_0 = arith.constant 0 : i32
    %c0_i32_1 = arith.constant 0 : i32
    return %c0_i32, %c0_i32_0 : i32, i32
  }
  func.func @transform_9(%arg0: i32) -> (i32, i32) {
    %c0_i32 = arith.constant 0 : i32
    %c0_i32_0 = arith.constant 0 : i32
    return %c0_i32, %arg0 : i32, i32
  }
}

</mosaic_0001>

<llo_original>
// kernel: grasp_energy_forward.1
$region0: #{grasp_energy_forward.1}
  #allocation0 [shape = 'u32[]', space=smem, size = 0x4, offset = 0x4, fixed_abs, tag = 'smem constant byte address 0x4 - core index']
  #allocation1 [shape = 'u32[144,128]{1,0:T(1,128)}', space=vmem, size = 0x12000, scoped, tag = 'internal scratch']
  #allocation2 [shape = 'f32[1,1]{1,0:T(1,128)S(6)}', space=smem, size = 0x200, scoped, tag = 'scoped memory for grasp_energy_forward.1']
  %s0 = inlined_call_operand.vmem [shape: f32[16,128], index: 0, kind: input, shape index: {}]
  %s1 = inlined_call_operand.vmem [shape: f32[128,256], index: 1, kind: input, shape index: {}]
  %s2 = inlined_call_operand.vmem [shape: f32[1,256], index: 2, kind: input, shape index: {}]
  %s3 = inlined_call_operand.hbm [shape: f32[256,256], index: 3, kind: input, shape index: {}]
  %s4 = inlined_call_operand.vmem [shape: f32[1,256], index: 4, kind: input, shape index: {}]
  %s5 = inlined_call_operand.hbm [shape: f32[256,256], index: 5, kind: input, shape index: {}]
  %s6 = inlined_call_operand.vmem [shape: f32[1,256], index: 6, kind: input, shape index: {}]
  %s7 = inlined_call_operand.vmem [shape: f32[1,256], index: 7, kind: input, shape index: {}]
  %s8 = inlined_call_operand.<no memory space> [shape: f32[1,1], index: 8, kind: input, shape index: {}]
  %s9 = inlined_call_operand.hbm [shape: f32[1,16], index: 9, kind: output, shape index: {}]
  %s10 = sld [smem:[#allocation0]]
  $region54: #{grasp_energy_forward.1} parent=0
    _
  %s12 = ssub.s32 1, %s10
  %s13 = scalar_select 0, %s12, %s10
  %14 = sst [smem:[#allocation2]] %s8
  $region1: #{grasp_energy_forward.1} parent=0
    #allocation3 [shape = 'u8[262144]{0}', space=vmem, size = 0x40000, scoped, tag = 'input window, operand 3, single buffered']
    #allocation4 [shape = 's32[1]{0}', space=sflag, size = 0x4, scoped, tag = 'scoped memory for grasp_energy_forward.1']
    #allocation5 [shape = 's32[1]{0}', space=sflag, size = 0x4, scoped, tag = 'scoped memory for grasp_energy_forward.1']
    #allocation6 [shape = 'u8[262144]{0}', space=vmem, size = 0x40000, scoped, tag = 'input window, operand 5, single buffered']
    #allocation7 [shape = 's32[1]{0}', space=sflag, size = 0x4, scoped, tag = 'scoped memory for grasp_energy_forward.1']
    #allocation8 [shape = 'u8[512]{0}', space=vmem, size = 0x400, scoped, tag = 'output window, operand 0, single buffered']
    %15 = vsyncpa [#allocation4], 0
    %16 = vsyncpa [#allocation7], 0
    %17 = vsyncpa [#allocation5], 0
    // Predicated region
    $region2: #{grasp_energy_forward.1} parent=1 // pred_check
      _
    $region3: #{grasp_energy_forward.1} parent=1 // pred_check_branch
      %19 = sbr.rel (0) target = $region5
    $region4: #{grasp_energy_forward.1} parent=1 // pred_region
      _
    $region5: #{grasp_energy_forward.1} parent=1 // pred_fallthru
      _
    // Predicated region
    $region6: #{grasp_energy_forward.1} parent=1 // pred_check
      _
    $region7: #{grasp_energy_forward.1} parent=1 // pred_check_branch
      %21 = sbr.rel (0) target = $region9
    $region8: #{grasp_energy_forward.1} parent=1 // pred_region
      _
    $region9: #{grasp_energy_forward.1} parent=1 // pred_fallthru
      _
    // Predicated region
    $region10: #{grasp_energy_forward.1} parent=1 // pred_check
      _
    $region11: #{grasp_energy_forward.1} parent=1 // pred_check_branch
      %23 = sbr.rel (0) target = $region13
    $region12: #{grasp_energy_forward.1} parent=1 // pred_region
      _
    $region13: #{grasp_energy_forward.1} parent=1 // pred_fallthru
      _
    // Predicated region
    $region14: #{grasp_energy_forward.1} parent=1 // pred_check
      _
    $region15: #{grasp_energy_forward.1} parent=1 // pred_check_branch
      %25 = sbr.rel (0) target = $region17
    $region16: #{grasp_energy_forward.1} parent=1 // pred_region
      %s27 = ssub.s32 8192, 8192
      %28 = vsyncadd [#allocation4], %s27
      %s29 = sshll.u32 [#allocation3], 4
      %s30 = int_to_ptr.vmem [resolvable:$true] %s29
      %35 = dma.hbm_to_vmem [thread:$0]  %s3, 8192, %s30, [#allocation4], 256, 256, 16
    $region17: #{grasp_energy_forward.1} parent=1 // pred_fallthru
      _
    // Predicated region
    $region18: #{grasp_energy_forward.1} parent=1 // pred_check
      _
    $region19: #{grasp_energy_forward.1} parent=1 // pred_check_branch
      %37 = sbr.rel (0) target = $region21
    $region20: #{grasp_energy_forward.1} parent=1 // pred_region
      _
    $region21: #{grasp_energy_forward.1} parent=1 // pred_fallthru
      _
    // Predicated region
    $region22: #{grasp_energy_forward.1} parent=1 // pred_check
      _
    $region23: #{grasp_energy_forward.1} parent=1 // pred_check_branch
      %39 = sbr.rel (0) target = $region25
    $region24: #{grasp_energy_forward.1} parent=1 // pred_region
      %s41 = ssub.s32 8192, 8192
      %42 = vsyncadd [#allocation7], %s41
      %s43 = sshll.u32 [#allocation6], 4
      %s44 = int_to_ptr.vmem [resolvable:$true] %s43
      %49 = dma.hbm_to_vmem [thread:$0]  %s5, 8192, %s44, [#allocation7], 256, 256, 16
    $region25: #{grasp_energy_forward.1} parent=1 // pred_fallthru
      _
    // Predicated region
    $region26: #{grasp_energy_forward.1} parent=1 // pred_check
      _
    $region27: #{grasp_energy_forward.1} parent=1 // pred_check_branch
      %51 = sbr.rel (0) target = $region29
    $region28: #{grasp_energy_forward.1} parent=1 // pred_region
      _
    $region29: #{grasp_energy_forward.1} parent=1 // pred_fallthru
      _
    // Predicated region
    $region30: #{grasp_energy_forward.1} parent=1 // pred_check
      _
    $region31: #{grasp_energy_forward.1} parent=1 // pred_check_branch
      %53 = sbr.rel (0) target = $region33
    $region32: #{grasp_energy_forward.1} parent=1 // pred_region
      _
    $region33: #{grasp_energy_forward.1} parent=1 // pred_fallthru
      _
    // Predicated region
    $region34: #{grasp_energy_forward.1} parent=1 // pred_check
      _
    $region35: #{grasp_energy_forward.1} parent=1 // pred_check_branch
      %55 = sbr.rel (0) target = $region37
    $region36: #{grasp_energy_forward.1} parent=1 // pred_region
      _
    $region37: #{grasp_energy_forward.1} parent=1 // pred_fallthru
      _
    // Predicated region
    $region38: #{grasp_energy_forward.1} parent=1 // pred_check
      _
    $region39: #{grasp_energy_forward.1} parent=1 // pred_check_branch
      %57 = sbr.rel (0) target = $region41
    $region40: #{grasp_energy_forward.1} parent=1 // pred_region
      %58 = dma.done [#allocation4], 8192
    $region41: #{grasp_energy_forward.1} parent=1 // pred_fallthru
      _
    // Predicated region
    $region42: #{grasp_energy_forward.1} parent=1 // pred_check
      _
    $region43: #{grasp_energy_forward.1} parent=1 // pred_check_branch
      %60 = sbr.rel (0) target = $region45
    $region44: #{grasp_energy_forward.1} parent=1 // pred_region
      %61 = dma.done [#allocation7], 8192
    $region45: #{grasp_energy_forward.1} parent=1 // pred_fallthru
      _
    %v62 = vld [vmem:[%s0] sm:$0xff]
    %v63 = vld [vmem:[%s0 + $0x8] sm:$0xff]
    %v64 = vld [vmem:[%s1] sm:$0xff]
    %v65 = vld [vmem:[%s1 + $0x8] sm:$0xff]
    %v66 = vld [vmem:[%s1 + $0x10] sm:$0xff]
    %v67 = vld [vmem:[%s1 + $0x18] sm:$0xff]
    %v68 = vld [vmem:[%s1 + $0x20] sm:$0xff]
    %v69 = vld [vmem:[%s1 + $0x28] sm:$0xff]
    %v70 = vld [vmem:[%s1 + $0x30] sm:$0xff]
    %v71 = vld [vmem:[%s1 + $0x38] sm:$0xff]
    %v72 = vld [vmem:[%s1 + $0x40] sm:$0xff]
    %v73 = vld [vmem:[%s1 + $0x48] sm:$0xff]
    %v74 = vld [vmem:[%s1 + $0x50] sm:$0xff]
    %v75 = vld [vmem:[%s1 + $0x58] sm:$0xff]
    %v76 = vld [vmem:[%s1 + $0x60] sm:$0xff]
    %v77 = vld [vmem:[%s1 + $0x68] sm:$0xff]
    %v78 = vld [vmem:[%s1 + $0x70] sm:$0xff]
    %v79 = vld [vmem:[%s1 + $0x78] sm:$0xff]
    %v80 = vld [vmem:[%s1 + $0x80] sm:$0xff]
    %v81 = vld [vmem:[%s1 + $0x88] sm:$0xff]
    %v82 = vld [vmem:[%s1 + $0x90] sm:$0xff]
    %v83 = vld [vmem:[%s1 + $0x98] sm:$0xff]
    %v84 = vld [vmem:[%s1 + $0xa0] sm:$0xff]
    %v85 = vld [vmem:[%s1 + $0xa8] sm:$0xff]
    %v86 = vld [vmem:[%s1 + $0xb0] sm:$0xff]
    %v87 = vld [vmem:[%s1 + $0xb8] sm:$0xff]
    %v88 = vld [vmem:[%s1 + $0xc0] sm:$0xff]
    %v89 = vld [vmem:[%s1 + $0xc8] sm:$0xff]
    %v90 = vld [vmem:[%s1 + $0xd0] sm:$0xff]
    %v91 = vld [vmem:[%s1 + $0xd8] sm:$0xff]
    %v92 = vld [vmem:[%s1 + $0xe0] sm:$0xff]
    %v93 = vld [vmem:[%s1 + $0xe8] sm:$0xff]
    %v94 = vld [vmem:[%s1 + $0xf0] sm:$0xff]
    %v95 = vld [vmem:[%s1 + $0xf8] sm:$0xff]
    %v96 = vld [vmem:[%s2] sm:$0x3]
    %v98 = vlaneseq
    %v99 = vshrl.u32 %v98, 7
    %v100 = vsub.s32 0, %v99
    %v101 = vrot.slane %v96, %v100
    %v102 = vlaneseq
    %v103 = vshrl.u32 %v102, 7
    %v104 = vsub.s32 1, %v103
    %v105 = vrot.slane %v96, %v104
    %108 = vmatprep.subr.mxu0 %v95
    %109 = vmatpush1.msra.mxu0 %v94
    %110 = vmatprep.subr.mxu0 %v93
    %111 = vmatpush1.msra.mxu0 %v92
    %112 = vmatprep.subr.mxu0 %v91
    %113 = vmatpush1.msra.mxu0 %v90
    %114 = vmatprep.subr.mxu0 %v89
    %115 = vmatpush1.msra.mxu0 %v88
    %116 = vmatprep.subr.mxu0 %v87
    %117 = vmatpush1.msra.mxu0 %v86
    %118 = vmatprep.subr.mxu0 %v85
    %119 = vmatpush1.msra.mxu0 %v84
    %120 = vmatprep.subr.mxu0 %v83
    %121 = vmatpush1.msra.mxu0 %v82
    %122 = vmatprep.subr.mxu0 %v81
    %123 = vmatpush1.msra.mxu0 %v80
    %124 = vmatprep.subr.mxu0 %v79
    %125 = vmatpush1.msra.mxu0 %v78
    %126 = vmatprep.subr.mxu0 %v77
    %127 = vmatpush1.msra.mxu0 %v76
    %128 = vmatprep.subr.mxu0 %v75
    %129 = vmatpush1.msra.mxu0 %v74
    %130 = vmatprep.subr.mxu0 %v73
    %131 = vmatpush1.msra.mxu0 %v72
    %132 = vmatprep.subr.mxu0 %v71
    %133 = vmatpush1.msra.mxu0 %v70
    %134 = vmatprep.subr.mxu0 %v69
    %135 = vmatpush1.msra.mxu0 %v68
    %136 = vmatprep.subr.mxu0 %v67
    %137 = vmatpush1.msra.mxu0 %v66
    %138 = vmatprep.subr.mxu0 %v65
    %139 = vmatpush1.msra.mxu0 %v64
    %140 = vmatprep.subr.mxu0 0.0
    %141 = vmatpush2.msra.mxu0 0.0
    %142 = vmatprep.subr.mxu0 0.0
    %143 = vmatpush2.msra.mxu0 0.0
    %144 = vmatprep.subr.mxu0 0.0
    %145 = vmatpush2.msra.mxu0 0.0
    %146 = vmatprep.subr.mxu0 0.0
    %147 = vmatpush2.msra.mxu0 0.0
    %148 = vmatprep.subr.mxu0 0.0
    %149 = vmatpush2.msra.mxu0 0.0
    %150 = vmatprep.subr.mxu0 0.0
    %151 = vmatpush2.msra.mxu0 0.0
    %152 = vmatprep.subr.mxu0 0.0
    %153 = vmatpush2.msra.mxu0 0.0
    %154 = vmatprep.subr.mxu0 0.0
    %155 = vmatpush2.msra.mxu0 0.0
    %156 = vmatprep.subr.mxu0 0.0
    %157 = vmatpush2.msra.mxu0 0.0
    %158 = vmatprep.subr.mxu0 0.0
    %159 = vmatpush2.msra.mxu0 0.0
    %160 = vmatprep.subr.mxu0 0.0
    %161 = vmatpush2.msra.mxu0 0.0
    %162 = vmatprep.subr.mxu0 0.0
    %163 = vmatpush2.msra.mxu0 0.0
    %164 = vmatprep.subr.mxu0 0.0
    %165 = vmatpush2.msra.mxu0 0.0
    %166 = vmatprep.subr.mxu0 0.0
    %167 = vmatpush2.msra.mxu0 0.0
    %168 = vmatprep.subr.mxu0 0.0
    %169 = vmatpush2.msra.mxu0 0.0
    %170 = vmatprep.subr.mxu0 0.0
    %171 = vmatpush2.msra.mxu0 0.0
    %172 = vmatprep.mubr.f32.mxu0 0.0
    %173 = vmatmul.mubr.f32.gmra.mxu0 %v62
    %v174 = vpop.f32.mrf.mxu0
    %v175 = vadd.f32 %v101, %v174
    %v176 = vpop.f32.mrf.mxu0
    %v177 = vadd.f32 %v105, %v176
    %178 = vmatprep.mubr.f32.mxu0 0.0
    %179 = vmatmul.mubr.f32.gmra.mxu0 %v63
    %v180 = vpop.f32.mrf.mxu0
    %v181 = vadd.f32 %v101, %v180
    %v182 = vpop.f32.mrf.mxu0
    %v183 = vadd.f32 %v105, %v182
    %184 = vdwg.mxu0
    %vm185 = vcmp.gt.f32.partialorder %v175, 0.0
    %vm186 = vcmp.gt.f32.partialorder %v177, 0.0
    %vm187 = vcmp.gt.f32.partialorder %v181, 0.0
    %vm188 = vcmp.gt.f32.partialorder %v183, 0.0
    %v189 = vmin.f32 %v175, 0.0
    %v190 = vmin.f32 %v177, 0.0
    %v191 = vmin.f32 %v181, 0.0
    %v192 = vmin.f32 %v183, 0.0
    %v193 = vmul.f32 %v189, 1.442695
    %v194 = vpow.pop %v193
    %v195 = vmul.f32 %v190, 1.442695
    %v196 = vpow.pop %v195
    %v197 = vmul.f32 %v191, 1.442695
    %v198 = vpow.pop %v197
    %v199 = vmul.f32 %v192, 1.442695
    %v200 = vpow.pop %v199
    %v201 = vsub.f32 %v194, 1.0
    %v202 = vsub.f32 %v196, 1.0
    %v203 = vsub.f32 %v198, 1.0
    %v204 = vsub.f32 %v200, 1.0
    %v205 = vmul.f32 %v201, 1.6732632
    %v206 = vmul.f32 %v202, 1.6732632
    %v207 = vmul.f32 %v203, 1.6732632
    %v208 = vmul.f32 %v204, 1.6732632
    %v209 = vsel %vm185, %v175, %v205
    %v210 = vsel %vm186, %v177, %v206
    %v211 = vsel %vm187, %v181, %v207
    %v212 = vsel %vm188, %v183, %v208
    %v213 = vmul.f32 %v209, 1.050701
    %v214 = vmul.f32 %v210, 1.050701
    %v215 = vmul.f32 %v211, 1.050701
    %v216 = vmul.f32 %v212, 1.050701
    %v217 = vld [vmem:[#allocation3] sm:$0xff]
    %v218 = vld [vmem:[#allocation3 + $0x8] sm:$0xff]
    %v219 = vld [vmem:[#allocation3 + $0x10] sm:$0xff]
    %v220 = vld [vmem:[#allocation3 + $0x18] sm:$0xff]
    %v221 = vld [vmem:[#allocation3 + $0x20] sm:$0xff]
    %v222 = vld [vmem:[#allocation3 + $0x28] sm:$0xff]
    %v223 = vld [vmem:[#allocation3 + $0x30] sm:$0xff]
    %v224 = vld [vmem:[#allocation3 + $0x38] sm:$0xff]
    %v225 = vld [vmem:[#allocation3 + $0x40] sm:$0xff]
    %v226 = vld [vmem:[#allocation3 + $0x48] sm:$0xff]
    %v227 = vld [vmem:[#allocation3 + $0x50] sm:$0xff]
    %v228 = vld [vmem:[#allocation3 + $0x58] sm:$0xff]
    %v229 = vld [vmem:[#allocation3 + $0x60] sm:$0xff]
    %v230 = vld [vmem:[#allocation3 + $0x68] sm:$0xff]
    %v231 = vld [vmem:[#allocation3 + $0x70] sm:$0xff]
    %v232 = vld [vmem:[#allocation3 + $0x78] sm:$0xff]
    %v233 = vld [vmem:[#allocation3 + $0x80] sm:$0xff]
    %v234 = vld [vmem:[#allocation3 + $0x88] sm:$0xff]
    %v235 = vld [vmem:[#allocation3 + $0x90] sm:$0xff]
    %v236 = vld [vmem:[#allocation3 + $0x98] sm:$0xff]
    %v237 = vld [vmem:[#allocation3 + $0xa0] sm:$0xff]
    %v238 = vld [vmem:[#allocation3 + $0xa8] sm:$0xff]
    %v239 = vld [vmem:[#allocation3 + $0xb0] sm:$0xff]
    %v240 = vld [vmem:[#allocation3 + $0xb8] sm:$0xff]
    %v241 = vld [vmem:[#allocation3 + $0xc0] sm:$0xff]
    %v242 = vld [vmem:[#allocation3 + $0xc8] sm:$0xff]
    %v243 = vld [vmem:[#allocation3 + $0xd0] sm:$0xff]
    %v244 = vld [vmem:[#allocation3 + $0xd8] sm:$0xff]
    %v245 = vld [vmem:[#allocation3 + $0xe0] sm:$0xff]
    %v246 = vld [vmem:[#allocation3 + $0xe8] sm:$0xff]
    %v247 = vld [vmem:[#allocation3 + $0xf0] sm:$0xff]
    %v248 = vld [vmem:[#allocation3 + $0xf8] sm:$0xff]
    %v249 = vld [vmem:[#allocation3 + $0x100] sm:$0xff]
    %v250 = vld [vmem:[#allocation3 + $0x108] sm:$0xff]
    %v251 = vld [vmem:[#allocation3 + $0x110] sm:$0xff]
    %v252 = vld [vmem:[#allocation3 + $0x118] sm:$0xff]
    %v253 = vld [vmem:[#allocation3 + $0x120] sm:$0xff]
    %v254 = vld [vmem:[#allocation3 + $0x128] sm:$0xff]
    %v255 = vld [vmem:[#allocation3 + $0x130] sm:$0xff]
    %v256 = vld [vmem:[#allocation3 + $0x138] sm:$0xff]
    %v257 = vld [vmem:[#allocation3 + $0x140] sm:$0xff]
    %v258 = vld [vmem:[#allocation3 + $0x148] sm:$0xff]
    %v259 = vld [vmem:[#allocation3 + $0x150] sm:$0xff]
    %v260 = vld [vmem:[#allocation3 + $0x158] sm:$0xff]
    %v261 = vld [vmem:[#allocation3 + $0x160] sm:$0xff]
    %v262 = vld [vmem:[#allocation3 + $0x168] sm:$0xff]
    %v263 = vld [vmem:[#allocation3 + $0x170] sm:$0xff]
    %v264 = vld [vmem:[#allocation3 + $0x178] sm:$0xff]
    %v265 = vld [vmem:[#allocation3 + $0x180] sm:$0xff]
    %v266 = vld [vmem:[#allocation3 + $0x188] sm:$0xff]
    %v267 = vld [vmem:[#allocation3 + $0x190] sm:$0xff]
    %v268 = vld [vmem:[#allocation3 + $0x198] sm:$0xff]
    %v269 = vld [vmem:[#allocation3 + $0x1a0] sm:$0xff]
    %v270 = vld [vmem:[#allocation3 + $0x1a8] sm:$0xff]
    %v271 = vld [vmem:[#allocation3 + $0x1b0] sm:$0xff]
    %v272 = vld [vmem:[#allocation3 + $0x1b8] sm:$0xff]
    %v273 = vld [vmem:[#allocation3 + $0x1c0] sm:$0xff]
    %v274 = vld [vmem:[#allocation3 + $0x1c8] sm:$0xff]
    %v275 = vld [vmem:[#allocation3 + $0x1d0] sm:$0xff]
    %v276 = vld [vmem:[#allocation3 + $0x1d8] sm:$0xff]
    %v277 = vld [vmem:[#allocation3 + $0x1e0] sm:$0xff]
    %v278 = vld [vmem:[#allocation3 + $0x1e8] sm:$0xff]
    %v279 = vld [vmem:[#allocation3 + $0x1f0] sm:$0xff]
    %v280 = vld [vmem:[#allocation3 + $0x1f8] sm:$0xff]
    %v281 = vld [vmem:[%s4] sm:$0x3]
    %v283 = vlaneseq
    %v284 = vshrl.u32 %v283, 7
    %v285 = vsub.s32 0, %v284
    %v286 = vrot.slane %v281, %v285
    %v287 = vlaneseq
    %v288 = vshrl.u32 %v287, 7
    %v289 = vsub.s32 1, %v288
    %v290 = vrot.slane %v281, %v289
    %293 = vmatprep.subr.mxu0 %v248
    %294 = vmatpush1.msra.mxu0 %v247
    %295 = vmatprep.subr.mxu0 %v246
    %296 = vmatpush1.msra.mxu0 %v245
    %297 = vmatprep.subr.mxu0 %v244
    %298 = vmatpush1.msra.mxu0 %v243
    %299 = vmatprep.subr.mxu0 %v242
    %300 = vmatpush1.msra.mxu0 %v241
    %301 = vmatprep.subr.mxu0 %v240
    %302 = vmatpush1.msra.mxu0 %v239
    %303 = vmatprep.subr.mxu0 %v238
    %304 = vmatpush1.msra.mxu0 %v237
    %305 = vmatprep.subr.mxu0 %v236
    %306 = vmatpush1.msra.mxu0 %v235
    %307 = vmatprep.subr.mxu0 %v234
    %308 = vmatpush1.msra.mxu0 %v233
    %309 = vmatprep.subr.mxu0 %v232
    %310 = vmatpush1.msra.mxu0 %v231
    %311 = vmatprep.subr.mxu0 %v230
    %312 = vmatpush1.msra.mxu0 %v229
    %313 = vmatprep.subr.mxu0 %v228
    %314 = vmatpush1.msra.mxu0 %v227
    %315 = vmatprep.subr.mxu0 %v226
    %316 = vmatpush1.msra.mxu0 %v225
    %317 = vmatprep.subr.mxu0 %v224
    %318 = vmatpush1.msra.mxu0 %v223
    %319 = vmatprep.subr.mxu0 %v222
    %320 = vmatpush1.msra.mxu0 %v221
    %321 = vmatprep.subr.mxu0 %v220
    %322 = vmatpush1.msra.mxu0 %v219
    %323 = vmatprep.subr.mxu0 %v218
    %324 = vmatpush1.msra.mxu0 %v217
    %325 = vmatprep.subr.mxu0 %v280
    %326 = vmatpush2.msra.mxu0 %v279
    %327 = vmatprep.subr.mxu0 %v278
    %328 = vmatpush2.msra.mxu0 %v277
    %329 = vmatprep.subr.mxu0 %v276
    %330 = vmatpush2.msra.mxu0 %v275
    %331 = vmatprep.subr.mxu0 %v274
    %332 = vmatpush2.msra.mxu0 %v273
    %333 = vmatprep.subr.mxu0 %v272
    %334 = vmatpush2.msra.mxu0 %v271
    %335 = vmatprep.subr.mxu0 %v270
    %336 = vmatpush2.msra.mxu0 %v269
    %337 = vmatprep.subr.mxu0 %v268
    %338 = vmatpush2.msra.mxu0 %v267
    %339 = vmatprep.subr.mxu0 %v266
    %340 = vmatpush2.msra.mxu0 %v265
    %341 = vmatprep.subr.mxu0 %v264
    %342 = vmatpush2.msra.mxu0 %v263
    %343 = vmatprep.subr.mxu0 %v262
    %344 = vmatpush2.msra.mxu0 %v261
    %345 = vmatprep.subr.mxu0 %v260
    %346 = vmatpush2.msra.mxu0 %v259
    %347 = vmatprep.subr.mxu0 %v258
    %348 = vmatpush2.msra.mxu0 %v257
    %349 = vmatprep.subr.mxu0 %v256
    %350 = vmatpush2.msra.mxu0 %v255
    %351 = vmatprep.subr.mxu0 %v254
    %352 = vmatpush2.msra.mxu0 %v253
    %353 = vmatprep.subr.mxu0 %v252
    %354 = vmatpush2.msra.mxu0 %v251
    %355 = vmatprep.subr.mxu0 %v250
    %356 = vmatpush2.msra.mxu0 %v249
    %357 = vmatprep.mubr.f32.mxu0 %v214
    %358 = vmatmul.mubr.f32.gmra.mxu0 %v213
    %v359 = vpop.f32.mrf.mxu0
    %v360 = vadd.f32 %v286, %v359
    %v361 = vpop.f32.mrf.mxu0
    %v362 = vadd.f32 %v290, %v361
    %363 = vmatprep.mubr.f32.mxu0 %v216
    %364 = vmatmul.mubr.f32.gmra.mxu0 %v215
    %v365 = vpop.f32.mrf.mxu0
    %v366 = vadd.f32 %v286, %v365
    %v367 = vpop.f32.mrf.mxu0
    %v368 = vadd.f32 %v290, %v367
    %369 = vdwg.mxu0
    %vm370 = vcmp.gt.f32.partialorder %v360, 0.0
    %vm371 = vcmp.gt.f32.partialorder %v362, 0.0
    %vm372 = vcmp.gt.f32.partialorder %v366, 0.0
    %vm373 = vcmp.gt.f32.partialorder %v368, 0.0
    %v374 = vmin.f32 %v360, 0.0
    %v375 = vmin.f32 %v362, 0.0
    %v376 = vmin.f32 %v366, 0.0
    %v377 = vmin.f32 %v368, 0.0
    %v378 = vmul.f32 %v374, 1.442695
    %v379 = vpow.pop %v378
    %v380 = vmul.f32 %v375, 1.442695
    %v381 = vpow.pop %v380
    %v382 = vmul.f32 %v376, 1.442695
    %v383 = vpow.pop %v382
    %v384 = vmul.f32 %v377, 1.442695
    %v385 = vpow.pop %v384
    %v386 = vsub.f32 %v379, 1.0
    %v387 = vsub.f32 %v381, 1.0
    %v388 = vsub.f32 %v383, 1.0
    %v389 = vsub.f32 %v385, 1.0
    %v390 = vmul.f32 %v386, 1.6732632
    %v391 = vmul.f32 %v387, 1.6732632
    %v392 = vmul.f32 %v388, 1.6732632
    %v393 = vmul.f32 %v389, 1.6732632
    %v394 = vsel %vm370, %v360, %v390
    %v395 = vsel %vm371, %v362, %v391
    %v396 = vsel %vm372, %v366, %v392
    %v397 = vsel %vm373, %v368, %v393
    %v398 = vmul.f32 %v394, 1.050701
    %v399 = vmul.f32 %v395, 1.050701
    %v400 = vmul.f32 %v396, 1.050701
    %v401 = vmul.f32 %v397, 1.050701
    %v402 = vld [vmem:[#allocation6] sm:$0xff]
    %v403 = vld [vmem:[#allocation6 + $0x8] sm:$0xff]
    %v404 = vld [vmem:[#allocation6 + $0x10] sm:$0xff]
    %v405 = vld [vmem:[#allocation6 + $0x18] sm:$0xff]
    %v406 = vld [vmem:[#allocation6 + $0x20] sm:$0xff]
    %v407 = vld [vmem:[#allocation6 + $0x28] sm:$0xff]
    %v408 = vld [vmem:[#allocation6 + $0x30] sm:$0xff]
    %v409 = vld [vmem:[#allocation6 + $0x38] sm:$0xff]
    %v410 = vld [vmem:[#allocation6 + $0x40] sm:$0xff]
    %v411 = vld [vmem:[#allocation6 + $0x48] sm:$0xff]
    %v412 = vld [vmem:[#allocation6 + $0x50] sm:$0xff]
    %v413 = vld [vmem:[#allocation6 + $0x58] sm:$0xff]
    %v414 = vld [vmem:[#allocation6 + $0x60] sm:$0xff]
    %v415 = vld [vmem:[#allocation6 + $0x68] sm:$0xff]
    %v416 = vld [vmem:[#allocation6 + $0x70] sm:$0xff]
    %v417 = vld [vmem:[#allocation6 + $0x78] sm:$0xff]
    %v418 = vld [vmem:[#allocation6 + $0x80] sm:$0xff]
    %v419 = vld [vmem:[#allocation6 + $0x88] sm:$0xff]
    %v420 = vld [vmem:[#allocation6 + $0x90] sm:$0xff]
    %v421 = vld [vmem:[#allocation6 + $0x98] sm:$0xff]
    %v422 = vld [vmem:[#allocation6 + $0xa0] sm:$0xff]
    %v423 = vld [vmem:[#allocation6 + $0xa8] sm:$0xff]
    %v424 = vld [vmem:[#allocation6 + $0xb0] sm:$0xff]
    %v425 = vld [vmem:[#allocation6 + $0xb8] sm:$0xff]
    %v426 = vld [vmem:[#allocation6 + $0xc0] sm:$0xff]
    %v427 = vld [vmem:[#allocation6 + $0xc8] sm:$0xff]
    %v428 = vld [vmem:[#allocation6 + $0xd0] sm:$0xff]
    %v429 = vld [vmem:[#allocation6 + $0xd8] sm:$0xff]
    %v430 = vld [vmem:[#allocation6 + $0xe0] sm:$0xff]
    %v431 = vld [vmem:[#allocation6 + $0xe8] sm:$0xff]
    %v432 = vld [vmem:[#allocation6 + $0xf0] sm:$0xff]
    %v433 = vld [vmem:[#allocation6 + $0xf8] sm:$0xff]
    %v434 = vld [vmem:[#allocation6 + $0x100] sm:$0xff]
    %v435 = vld [vmem:[#allocation6 + $0x108] sm:$0xff]
    %v436 = vld [vmem:[#allocation6 + $0x110] sm:$0xff]
    %v437 = vld [vmem:[#allocation6 + $0x118] sm:$0xff]
    %v438 = vld [vmem:[#allocation6 + $0x120] sm:$0xff]
    %v439 = vld [vmem:[#allocation6 + $0x128] sm:$0xff]
    %v440 = vld [vmem:[#allocation6 + $0x130] sm:$0xff]
    %v441 = vld [vmem:[#allocation6 + $0x138] sm:$0xff]
    %v442 = vld [vmem:[#allocation6 + $0x140] sm:$0xff]
    %v443 = vld [vmem:[#allocation6 + $0x148] sm:$0xff]
    %v444 = vld [vmem:[#allocation6 + $0x150] sm:$0xff]
    %v445 = vld [vmem:[#allocation6 + $0x158] sm:$0xff]
    %v446 = vld [vmem:[#allocation6 + $0x160] sm:$0xff]
    %v447 = vld [vmem:[#allocation6 + $0x168] sm:$0xff]
    %v448 = vld [vmem:[#allocation6 + $0x170] sm:$0xff]
    %v449 = vld [vmem:[#allocation6 + $0x178] sm:$0xff]
    %v450 = vld [vmem:[#allocation6 + $0x180] sm:$0xff]
    %v451 = vld [vmem:[#allocation6 + $0x188] sm:$0xff]
    %v452 = vld [vmem:[#allocation6 + $0x190] sm:$0xff]
    %v453 = vld [vmem:[#allocation6 + $0x198] sm:$0xff]
    %v454 = vld [vmem:[#allocation6 + $0x1a0] sm:$0xff]
    %v455 = vld [vmem:[#allocation6 + $0x1a8] sm:$0xff]
    %v456 = vld [vmem:[#allocation6 + $0x1b0] sm:$0xff]
    %v457 = vld [vmem:[#allocation6 + $0x1b8] sm:$0xff]
    %v458 = vld [vmem:[#allocation6 + $0x1c0] sm:$0xff]
    %v459 = vld [vmem:[#allocation6 + $0x1c8] sm:$0xff]
    %v460 = vld [vmem:[#allocation6 + $0x1d0] sm:$0xff]
    %v461 = vld [vmem:[#allocation6 + $0x1d8] sm:$0xff]
    %v462 = vld [vmem:[#allocation6 + $0x1e0] sm:$0xff]
    %v463 = vld [vmem:[#allocation6 + $0x1e8] sm:$0xff]
    %v464 = vld [vmem:[#allocation6 + $0x1f0] sm:$0xff]
    %v465 = vld [vmem:[#allocation6 + $0x1f8] sm:$0xff]
    %v466 = vld [vmem:[%s6] sm:$0x3]
    %v468 = vlaneseq
    %v469 = vshrl.u32 %v468, 7
    %v470 = vsub.s32 0, %v469
    %v471 = vrot.slane %v466, %v470
    %v472 = vlaneseq
    %v473 = vshrl.u32 %v472, 7
    %v474 = vsub.s32 1, %v473
    %v475 = vrot.slane %v466, %v474
    %478 = vmatprep.subr.mxu0 %v433
    %479 = vmatpush1.msra.mxu0 %v432
    %480 = vmatprep.subr.mxu0 %v431
    %481 = vmatpush1.msra.mxu0 %v430
    %482 = vmatprep.subr.mxu0 %v429
    %483 = vmatpush1.msra.mxu0 %v428
    %484 = vmatprep.subr.mxu0 %v427
    %485 = vmatpush1.msra.mxu0 %v426
    %486 = vmatprep.subr.mxu0 %v425
    %487 = vmatpush1.msra.mxu0 %v424
    %488 = vmatprep.subr.mxu0 %v423
    %489 = vmatpush1.msra.mxu0 %v422
    %490 = vmatprep.subr.mxu0 %v421
    %491 = vmatpush1.msra.mxu0 %v420
    %492 = vmatprep.subr.mxu0 %v419
    %493 = vmatpush1.msra.mxu0 %v418
    %494 = vmatprep.subr.mxu0 %v417
    %495 = vmatpush1.msra.mxu0 %v416
    %496 = vmatprep.subr.mxu0 %v415
    %497 = vmatpush1.msra.mxu0 %v414
    %498 = vmatprep.subr.mxu0 %v413
    %499 = vmatpush1.msra.mxu0 %v412
    %500 = vmatprep.subr.mxu0 %v411
    %501 = vmatpush1.msra.mxu0 %v410
    %502 = vmatprep.subr.mxu0 %v409
    %503 = vmatpush1.msra.mxu0 %v408
    %504 = vmatprep.subr.mxu0 %v407
    %505 = vmatpush1.msra.mxu0 %v406
    %506 = vmatprep.subr.mxu0 %v405
    %507 = vmatpush1.msra.mxu0 %v404
    %508 = vmatprep.subr.mxu0 %v403
    %509 = vmatpush1.msra.mxu0 %v402
    %510 = vmatprep.subr.mxu0 %v465
    %511 = vmatpush2.msra.mxu0 %v464
    %512 = vmatprep.subr.mxu0 %v463
    %513 = vmatpush2.msra.mxu0 %v462
    %514 = vmatprep.subr.mxu0 %v461
    %515 = vmatpush2.msra.mxu0 %v460
    %516 = vmatprep.subr.mxu0 %v459
    %517 = vmatpush2.msra.mxu0 %v458
    %518 = vmatprep.subr.mxu0 %v457
    %519 = vmatpush2.msra.mxu0 %v456
    %520 = vmatprep.subr.mxu0 %v455
    %521 = vmatpush2.msra.mxu0 %v454
    %522 = vmatprep.subr.mxu0 %v453
    %523 = vmatpush2.msra.mxu0 %v452
    %524 = vmatprep.subr.mxu0 %v451
    %525 = vmatpush2.msra.mxu0 %v450
    %526 = vmatprep.subr.mxu0 %v449
    %527 = vmatpush2.msra.mxu0 %v448
    %528 = vmatprep.subr.mxu0 %v447
    %529 = vmatpush2.msra.mxu0 %v446
    %530 = vmatprep.subr.mxu0 %v445
    %531 = vmatpush2.msra.mxu0 %v444
    %532 = vmatprep.subr.mxu0 %v443
    %533 = vmatpush2.msra.mxu0 %v442
    %534 = vmatprep.subr.mxu0 %v441
    %535 = vmatpush2.msra.mxu0 %v440
    %536 = vmatprep.subr.mxu0 %v439
    %537 = vmatpush2.msra.mxu0 %v438
    %538 = vmatprep.subr.mxu0 %v437
    %539 = vmatpush2.msra.mxu0 %v436
    %540 = vmatprep.subr.mxu0 %v435
    %541 = vmatpush2.msra.mxu0 %v434
    %542 = vmatprep.mubr.f32.mxu0 %v399
    %543 = vmatmul.mubr.f32.gmra.mxu0 %v398
    %v544 = vpop.f32.mrf.mxu0
    %v545 = vadd.f32 %v471, %v544
    %v546 = vpop.f32.mrf.mxu0
    %v547 = vadd.f32 %v475, %v546
    %548 = vmatprep.mubr.f32.mxu0 %v401
    %549 = vmatmul.mubr.f32.gmra.mxu0 %v400
    %v550 = vpop.f32.mrf.mxu0
    %v551 = vadd.f32 %v471, %v550
    %v552 = vpop.f32.mrf.mxu0
    %v553 = vadd.f32 %v475, %v552
    %554 = vdwg.mxu0
    %vm555 = vcmp.gt.f32.partialorder %v545, 0.0
    %vm556 = vcmp.gt.f32.partialorder %v547, 0.0
    %vm557 = vcmp.gt.f32.partialorder %v551, 0.0
    %vm558 = vcmp.gt.f32.partialorder %v553, 0.0
    %v559 = vmin.f32 %v545, 0.0
    %v560 = vmin.f32 %v547, 0.0
    %v561 = vmin.f32 %v551, 0.0
    %v562 = vmin.f32 %v553, 0.0
    %v563 = vmul.f32 %v559, 1.442695
    %v564 = vpow.pop %v563
    %v565 = vmul.f32 %v560, 1.442695
    %v566 = vpow.pop %v565
    %v567 = vmul.f32 %v561, 1.442695
    %v568 = vpow.pop %v567
    %v569 = vmul.f32 %v562, 1.442695
    %v570 = vpow.pop %v569
    %v571 = vsub.f32 %v564, 1.0
    %v572 = vsub.f32 %v566, 1.0
    %v573 = vsub.f32 %v568, 1.0
    %v574 = vsub.f32 %v570, 1.0
    %v575 = vmul.f32 %v571, 1.6732632
    %v576 = vmul.f32 %v572, 1.6732632
    %v577 = vmul.f32 %v573, 1.6732632
    %v578 = vmul.f32 %v574, 1.6732632
    %v579 = vsel %vm555, %v545, %v575
    %v580 = vsel %vm556, %v547, %v576
    %v581 = vsel %vm557, %v551, %v577
    %v582 = vsel %vm558, %v553, %v578
    %v583 = vmul.f32 %v579, 1.050701
    %v584 = vmul.f32 %v580, 1.050701
    %v585 = vmul.f32 %v581, 1.050701
    %v586 = vmul.f32 %v582, 1.050701
    %v587 = vld [vmem:[%s7] sm:$0x3]
    %s588 = sld [smem:[#allocation2]]
    %v589 = vstv %s588
    %v591 = vlaneseq
    %v592 = vshrl.u32 %v591, 7
    %v593 = vsub.s32 0, %v592
    %v594 = vrot.slane %v587, %v593
    %v595 = vlaneseq
    %v596 = vshrl.u32 %v595, 7
    %v597 = vsub.s32 1, %v596
    %v598 = vrot.slane %v587, %v597
    %601 = vmatprep.subr.mxu0 0.0
    %602 = vmatpush1.xpose.msra.mxu0 0.0
    %603 = vmatprep.subr.mxu0 0.0
    %604 = vmatpush1.xpose.msra.mxu0 0.0
    %605 = vmatprep.subr.mxu0 0.0
    %606 = vmatpush1.xpose.msra.mxu0 0.0
    %607 = vmatprep.subr.mxu0 0.0
    %608 = vmatpush1.xpose.msra.mxu0 0.0
    %609 = vmatprep.subr.mxu0 0.0
    %610 = vmatpush1.xpose.msra.mxu0 0.0
    %611 = vmatprep.subr.mxu0 0.0
    %612 = vmatpush1.xpose.msra.mxu0 0.0
    %613 = vmatprep.subr.mxu0 0.0
    %614 = vmatpush1.xpose.msra.mxu0 0.0
    %615 = vmatprep.subr.mxu0 0.0
    %616 = vmatpush1.xpose.msra.mxu0 0.0
    %617 = vmatprep.subr.mxu0 0.0
    %618 = vmatpush1.xpose.msra.mxu0 0.0
    %619 = vmatprep.subr.mxu0 0.0
    %620 = vmatpush1.xpose.msra.mxu0 0.0
    %621 = vmatprep.subr.mxu0 0.0
    %622 = vmatpush1.xpose.msra.mxu0 0.0
    %623 = vmatprep.subr.mxu0 0.0
    %624 = vmatpush1.xpose.msra.mxu0 0.0
    %625 = vmatprep.subr.mxu0 0.0
    %626 = vmatpush1.xpose.msra.mxu0 0.0
    %627 = vmatprep.subr.mxu0 0.0
    %628 = vmatpush1.xpose.msra.mxu0 0.0
    %629 = vmatprep.subr.mxu0 %v586
    %630 = vmatpush1.xpose.msra.mxu0 %v585
    %631 = vmatprep.subr.mxu0 %v584
    %632 = vmatpush1.xpose.msra.mxu0 %v583
    %633 = vmatprep.subr.mxu0 0.0
    %634 = vmatpush2.xpose.msra.mxu0 0.0
    %635 = vmatprep.subr.mxu0 0.0
    %636 = vmatpush2.xpose.msra.mxu0 0.0
    %637 = vmatprep.subr.mxu0 0.0
    %638 = vmatpush2.xpose.msra.mxu0 0.0
    %639 = vmatprep.subr.mxu0 0.0
    %640 = vmatpush2.xpose.msra.mxu0 0.0
    %641 = vmatprep.subr.mxu0 0.0
    %642 = vmatpush2.xpose.msra.mxu0 0.0
    %643 = vmatprep.subr.mxu0 0.0
    %644 = vmatpush2.xpose.msra.mxu0 0.0
    %645 = vmatprep.subr.mxu0 0.0
    %646 = vmatpush2.xpose.msra.mxu0 0.0
    %647 = vmatprep.subr.mxu0 0.0
    %648 = vmatpush2.xpose.msra.mxu0 0.0
    %649 = vmatprep.subr.mxu0 0.0
    %650 = vmatpush2.xpose.msra.mxu0 0.0
    %651 = vmatprep.subr.mxu0 0.0
    %652 = vmatpush2.xpose.msra.mxu0 0.0
    %653 = vmatprep.subr.mxu0 0.0
    %654 = vmatpush2.xpose.msra.mxu0 0.0
    %655 = vmatprep.subr.mxu0 0.0
    %656 = vmatpush2.xpose.msra.mxu0 0.0
    %657 = vmatprep.subr.mxu0 0.0
    %658 = vmatpush2.xpose.msra.mxu0 0.0
    %659 = vmatprep.subr.mxu0 0.0
    %660 = vmatpush2.xpose.msra.mxu0 0.0
    %661 = vmatprep.subr.mxu0 0.0
    %662 = vmatpush2.xpose.msra.mxu0 0.0
    %663 = vmatprep.subr.mxu0 0.0
    %664 = vmatpush2.xpose.msra.mxu0 0.0
    %665 = vmatprep.mubr.f32.mxu0 %v598
    %666 = vmatmul.mubr.f32.gmra.mxu0 %v594
    %v667 = vpop.f32.mrf.mxu0
    %v668 = vadd.f32 %v589, %v667
    %v669 = vpop.f32.mrf.mxu0
    %670 = vdwg.mxu0
    %vm671 = vcmask 122880
    %672 = vst.msk [vmem:[#allocation8] sm:$0x1] %vm671, %v668
    // Predicated region
    $region46: #{grasp_energy_forward.1} parent=1 // pred_check
      _
    $region47: #{grasp_energy_forward.1} parent=1 // pred_check_branch
      %674 = sbr.rel (0) target = $region49
    $region48: #{grasp_energy_forward.1} parent=1 // pred_region
      %s676 = ssub.s32 16, 16
      %677 = vsyncadd [#allocation5], %s676
      %s679 = sshll.u32 [#allocation8], 4
      %s680 = int_to_ptr.vmem [resolvable:$true] %s679
      %682 = dma.vmem_to_hbm [thread:$0]  %s680, 16, %s9, [#allocation5]
    $region49: #{grasp_energy_forward.1} parent=1 // pred_fallthru
      _
    // Predicated region
    $region50: #{grasp_energy_forward.1} parent=1 // pred_check
      _
    $region51: #{grasp_energy_forward.1} parent=1 // pred_check_branch
      %684 = sbr.rel (0) target = $region53
    $region52: #{grasp_energy_forward.1} parent=1 // pred_region
      %685 = dma.done [#allocation5], 16
    $region53: #{grasp_energy_forward.1} parent=1 // pred_fallthru
      _
    %686 = vsyncpa [#allocation4], 1
    %687 = vsyncpa [#allocation7], 1
    %688 = vsyncpa [#allocation5], 1

</llo_original>
